<compile_context>
chip_gen: v6e
topology: v6e:2x2x1
jax: 0.10.0
libtpu: 0.0.40
codegen_flags: <defaults>
</compile_context>

<pallas_src>
import functools
import math

import jax
import jax.numpy as jnp
from jax.experimental import pallas as pl
from jax.experimental.pallas import tpu as pltpu


# ---------------------------------------------------------------------------
# shared in-kernel math
# ---------------------------------------------------------------------------
def _softplus_neg(x):
    """softplus(-x) = max(-x, 0) + log1p(exp(-|x|))  (numerically stable)."""
    return jnp.maximum(-x, 0.0) + jnp.log1p(jnp.exp(-jnp.abs(x)))


def _bce_terms(x, y, pwm1):
    """(1-y)*x + (1 + (pw-1)*y)*softplus(-x), with pwm1 = pw - 1."""
    sp = _softplus_neg(x)
    return x + sp + y * (pwm1 * sp - x)


def _scalar_corner_mask(shape):
    r = jax.lax.broadcasted_iota(jnp.int32, shape, 0)
    c = jax.lax.broadcasted_iota(jnp.int32, shape, 1)
    return jnp.logical_and(r == 0, c == 0)


def _write_block_total(out_ref, terms):
    """Reduce this block's terms to a scalar and store it at out[0,0]."""
    t = terms
    if t.ndim == 3:
        t = jnp.sum(t, axis=0)                       # fold batch-group axis (VPU adds)
    t = jnp.sum(t, axis=-1, keepdims=True)           # lane reduce -> (rows, 1)
    total = jnp.sum(t)                               # tiny sublane reduce -> scalar
    out_ref[...] = jnp.where(_scalar_corner_mask(out_ref.shape), total, 0.0)


# ---------------------------------------------------------------------------
# kernels
# ---------------------------------------------------------------------------
def _bce_mc_kernel(C, g, s_total, masked, pred_ref, gt_ref, pwm1_ref, out_ref):
    """Multiclass: pred rows are (member, class) pairs; one-hot built in-kernel."""
    i = pl.program_id(0)

    x = pred_ref[...].astype(jnp.float32)            # (Bg, R, ts), R = g*C
    labels = gt_ref[...].astype(jnp.int32)           # (Bg, g, ts) int class ids
    pwm1 = pwm1_ref[...]                             # (1, R, 1) = pos_weight - 1

    _, R, ts = x.shape
    row_id = jax.lax.broadcasted_iota(jnp.int32, x.shape, 1)   # row r = m*C + c

    if g == 1:
        # rows are classes directly: one-hot is a single compare.
        y = (labels == row_id).astype(jnp.float32)
    else:
        # shifted-label trick: rows of member m carry labels[m] + m*C, so the
        # one-hot test is a single equality against row_id (no div/mod).
        target = labels[:, 0:1, :]
        for m in range(1, g):
            target = jnp.where(row_id >= m * C,
                               labels[:, m:m + 1, :] + m * C, target)
        y = (target == row_id).astype(jnp.float32)

    terms = _bce_terms(x, y, pwm1)                   # (Bg, R, ts)
    _write_block_total(out_ref, terms)

    if masked:
        @pl.when(i == pl.num_programs(0) - 1)        # only the tail block pays
        def _():
            col = jax.lax.broadcasted_iota(jnp.int32, terms.shape, 2)
            valid = col < (s_total - i * ts)
            _write_block_total(out_ref, jnp.where(valid, terms, 0.0))


def _bce_bin_kernel(l_total, masked, pred_ref, gt_ref, pwm1_ref, out_ref):
    """Binary (C == 1): gt is already the {0,1} target."""
    i = pl.program_id(0)

    x = pred_ref[...].astype(jnp.float32)            # (r, ts)
    y = gt_ref[...].astype(jnp.float32)              # (r, ts)
    pwm1 = pwm1_ref[...]                             # (1, 1) = pos_weight - 1

    terms = _bce_terms(x, y, pwm1)
    _write_block_total(out_ref, terms)

    if masked:
        ts = x.shape[-1]

        @pl.when(i == pl.num_programs(0) - 1)
        def _():
            col = jax.lax.broadcasted_iota(jnp.int32, terms.shape, 1)
            valid = col < (l_total - i * ts)
            _write_block_total(out_ref, jnp.where(valid, terms, 0.0))


# ---------------------------------------------------------------------------
# generation-aware tiling
# ---------------------------------------------------------------------------
_TS_QUANTUM = 512


def _tpu_vmem_capacity_bytes():
    try:
        info = pltpu.get_tpu_info()
        for name in ("vmem_capacity_bytes", "vmem_size_bytes", "vmem_bytes"):
            cap = getattr(info, name, None)
            if cap:
                return int(cap)
    except Exception:
        pass
    return 64 * 1024 * 1024                          # conservative (v7x-sized) default


def _vmem_limit_bytes():
    cap = _tpu_vmem_capacity_bytes()
    if cap >= 96 * 1024 * 1024:                      # v5e / v6e: 128 MiB physical
        return 96 * 1024 * 1024
    return min(52 * 1024 * 1024, int(cap * 0.8))     # v7x: 64 MiB per TC


def _choose_ts(span, rows, in_itemsize, lbl_rows, lbl_itemsize, override=None):
    """Largest lane (spatial) tile that fits the per-step VMEM working set."""
    if override is not None:
        return max(1, min(int(override), span))
    budget = int(_vmem_limit_bytes() * 0.65)
    # 2x double-buffered streamed inputs + ~6 full-block f32 temporaries.
    bytes_per_col = (2 * rows * in_itemsize + 2 * lbl_rows * lbl_itemsize
                     + 6 * rows * 4)
    ts = budget // max(1, bytes_per_col)
    if ts >= span:
        return span
    ts = max((ts // _TS_QUANTUM) * _TS_QUANTUM, _TS_QUANTUM)
    return span if ts >= span else ts


# ---------------------------------------------------------------------------
# pallas_call wrappers
# ---------------------------------------------------------------------------
def _run_multiclass(x, labels, pwm1_rows, ts, C, g):
    Bg, R, S = x.shape
    nblk = pl.cdiv(S, ts)
    masked = (S % ts) != 0
    kernel = functools.partial(_bce_mc_kernel, C, g, S, masked)
    return pl.pallas_call(
        kernel,
        out_shape=jax.ShapeDtypeStruct((8, nblk * 128), jnp.float32),
        grid_spec=pltpu.PrefetchScalarGridSpec(
            num_scalar_prefetch=0,
            grid=(nblk,),
            in_specs=[
                pl.BlockSpec((Bg, R, ts), lambda i: (0, 0, i)),   # pred, lane-dense
                pl.BlockSpec((Bg, g, ts), lambda i: (0, 0, i)),   # int labels
                pl.BlockSpec((1, R, 1), lambda i: (0, 0, 0)),     # pos_weight - 1 / row
            ],
            out_specs=pl.BlockSpec((8, 128), lambda i: (0, i)),   # per-block partial
        ),
        compiler_params=pltpu.CompilerParams(
            dimension_semantics=("parallel",),   # no carried state -> megacore on v7x
            vmem_limit_bytes=_vmem_limit_bytes(),
        ),
    )(x, labels, pwm1_rows)


def _run_binary(x, y, pwm1, ts):
    r, L = x.shape
    nblk = pl.cdiv(L, ts)
    masked = (L % ts) != 0
    kernel = functools.partial(_bce_bin_kernel, L, masked)
    return pl.pallas_call(
        kernel,
        out_shape=jax.ShapeDtypeStruct((8, nblk * 128), jnp.float32),
        grid_spec=pltpu.PrefetchScalarGridSpec(
            num_scalar_prefetch=0,
            grid=(nblk,),
            in_specs=[
                pl.BlockSpec((r, ts), lambda i: (0, i)),          # logits
                pl.BlockSpec((r, ts), lambda i: (0, i)),          # targets
                pl.BlockSpec((1, 1), lambda i: (0, 0)),           # pos_weight - 1
            ],
            out_specs=pl.BlockSpec((8, 128), lambda i: (0, i)),
        ),
        compiler_params=pltpu.CompilerParams(
            dimension_semantics=("parallel",),
            vmem_limit_bytes=_vmem_limit_bytes(),
        ),
    )(x, y, pwm1)


def bce_with_logits_loss(pred, gt, weights, block_spatial=None):
    """Mirrors BCEWithLogitsLoss.forward(pred, gt) (mean reduction)."""
    weights = jnp.asarray(weights, jnp.float32)
    if pred.shape[1] == 1:
        # binary: pred (B,1,Z,H,W) logits, gt (B,Z,H,W) in {0,1}
        n_total = int(math.prod(pred.shape))          # == B*Z*H*W (channel dim is 1)
        r = 8
        while r > 1 and n_total % r:
            r //= 2
        L = n_total // r
        x = pred.reshape(r, L)                        # free contiguous reshape
        y = gt.reshape(r, L)
        pwm1 = (1.0 / weights[0] - 1.0).reshape(1, 1)  # torch: pos_weight = 1/w[0]
        ts = _choose_ts(L, rows=r, in_itemsize=pred.dtype.itemsize,
                        lbl_rows=r, lbl_itemsize=gt.dtype.itemsize,
                        override=block_spatial)
        partials = _run_binary(x, y, pwm1, ts)
        return jnp.sum(partials) / n_total
    else:
        # multiclass: pred (B,C,Z,H,W), gt (B,Z,H,W) int class labels
        B, C = pred.shape[0], pred.shape[1]
        S = int(math.prod(pred.shape[2:]))
        g = 8 // C if (C < 8 and 8 % C == 0 and B % (8 // C) == 0) else 1
        Bg, R = B // g, g * C
        x = pred.reshape(Bg, R, S)                    # free contiguous reshape
        labels = gt.reshape(Bg, g, S)
        if not jnp.issubdtype(labels.dtype, jnp.integer):
            labels = labels.astype(jnp.int32)
        pwm1_rows = jnp.tile(weights - 1.0, (g,)).reshape(1, R, 1)
        ts = _choose_ts(S, rows=Bg * R, in_itemsize=pred.dtype.itemsize,
                        lbl_rows=Bg * g, lbl_itemsize=labels.dtype.itemsize,
                        override=block_spatial)
        partials = _run_multiclass(x, labels, pwm1_rows, ts, C, g)
        return jnp.sum(partials) / (B * S * C)        # mean over all B*Z*H*W*C terms


# ---------------------------------------------------------------------------
# pure-JAX references
# ---------------------------------------------------------------------------
def _reference_multiclass(pred, gt, weights):
    x = pred.astype(jnp.float32)                                     # (B,C,Z,H,W)
    y = jax.nn.one_hot(gt, x.shape[1], axis=1, dtype=jnp.float32)    # (B,C,Z,H,W)
    pw = weights.astype(jnp.float32).reshape(1, -1, 1, 1, 1)
    sp = jnp.maximum(-x, 0.0) + jnp.log1p(jnp.exp(-jnp.abs(x)))
    loss = (1.0 - y) * x + (pw * y + (1.0 - y)) * sp
    return jnp.mean(loss)


def _reference_binary(pred, gt, weights):
    x = pred.astype(jnp.float32).reshape(-1)
    y = gt.astype(jnp.float32).reshape(-1)
    pw = 1.0 / weights[0]
    sp = jnp.maximum(-x, 0.0) + jnp.log1p(jnp.exp(-jnp.abs(x)))
    loss = (1.0 - y) * x + (pw * y + (1.0 - y)) * sp
    return jnp.mean(loss)


if __name__ == "__main__":
    key = jax.random.PRNGKey(0)
    k1, k2, k3, k4, k5, k6, k7 = jax.random.split(key, 7)

    # ---- multiclass: pred (B,C,Z,H,W), gt (B,Z,H,W) int labels (packed g=2)
    B, C, Z, H, W = 2, 4, 4, 8, 8
    pred = jax.random.normal(k1, (B, C, Z, H, W), dtype=jnp.float32)
    gt = jax.random.randint(k2, (B, Z, H, W), 0, C, dtype=jnp.int32)
    weights = jnp.array([0.5, 1.0, 2.0, 4.0], dtype=jnp.float32)

    loss_mc = jax.block_until_ready(bce_with_logits_loss(pred, gt, weights))
    ref_mc = _reference_multiclass(pred, gt, weights)
    assert jnp.allclose(loss_mc, ref_mc, atol=1e-5, rtol=1e-5), (loss_mc, ref_mc)

    # ---- multiclass, ragged spatial extent (S=300) + forced multi-step grid
    Z2, H2, W2 = 3, 10, 10
    pred2 = jax.random.normal(k3, (B, C, Z2, H2, W2), dtype=jnp.float32)
    gt2 = jax.random.randint(k4, (B, Z2, H2, W2), 0, C, dtype=jnp.int32)
    loss_mc2 = jax.block_until_ready(
        bce_with_logits_loss(pred2, gt2, weights, block_spatial=128))
    ref_mc2 = _reference_multiclass(pred2, gt2, weights)
    assert jnp.allclose(loss_mc2, ref_mc2, atol=1e-5, rtol=1e-5), (loss_mc2, ref_mc2)

    # ---- multiclass, bf16 logits (cast happens inside the kernel)
    pred_bf16 = pred.astype(jnp.bfloat16)
    loss_bf = jax.block_until_ready(bce_with_logits_loss(pred_bf16, gt, weights))
    ref_bf = _reference_multiclass(pred_bf16.astype(jnp.float32), gt, weights)
    assert jnp.allclose(loss_bf, ref_bf, atol=1e-4, rtol=1e-4), (loss_bf, ref_bf)

    # ---- multiclass fallback layout (C=3 does not divide 8 -> g=1)
    weights3 = jnp.array([0.5, 1.0, 2.0], dtype=jnp.float32)
    pred3 = jax.random.normal(k6, (B, 3, Z, H, W), dtype=jnp.float32)
    gt3 = jax.random.randint(k7, (B, Z, H, W), 0, 3, dtype=jnp.int32)
    loss_mc3 = jax.block_until_ready(bce_with_logits_loss(pred3, gt3, weights3))
    ref_mc3 = _reference_multiclass(pred3, gt3, weights3)
    assert jnp.allclose(loss_mc3, ref_mc3, atol=1e-5, rtol=1e-5), (loss_mc3, ref_mc3)

    # ---- binary: pred (B,1,Z,H,W), gt (B,Z,H,W) in {0,1}
    pred_b = jax.random.normal(k5, (B, 1, Z, H, W), dtype=jnp.float32)
    gt_b = jax.random.randint(k2, (B, Z, H, W), 0, 2, dtype=jnp.int32)
    loss_bin = jax.block_until_ready(
        bce_with_logits_loss(pred_b, gt_b, weights, block_spatial=128))
    ref_bin = _reference_binary(pred_b, gt_b, weights)
    assert jnp.allclose(loss_bin, ref_bin, atol=1e-5, rtol=1e-5), (loss_bin, ref_bin)

    print("KERNEL_OK")
</pallas_src>

<mosaic_0001>
module attributes {stable_mosaic.version = 11 : i64} {
  func.func @_bce_mc_kernel(%arg0: i32, %arg1: memref<1x8x256xf32, #tpu.memory_space<vmem>>, %arg2: memref<1x2x256xi32, #tpu.memory_space<vmem>>, %arg3: memref<1x8x1xf32, #tpu.memory_space<vmem>>, %arg4: memref<8x128xf32, #tpu.memory_space<vmem>>) attributes {dimension_semantics = [#tpu.dimension_semantics<parallel>], iteration_bounds = array<i64: 1>, scalar_prefetch = 0 : i64, scratch_operands = 0 : i64, tpu.core_type = #tpu.core_type<tc>, window_params = [{transform_indices = @transform_0, window_bounds = array<i64: 1, 8, 256>}, {transform_indices = @transform_1, window_bounds = array<i64: 1, 2, 256>}, {pipeline_mode = #tpu.pipeline_mode<synchronous>, transform_indices = @transform_2, window_bounds = array<i64: 1, 8, 1>}, {transform_indices = @transform_3, window_bounds = array<i64: 8, 128>}]} {
    %c0 = arith.constant 0 : index
    %c0_0 = arith.constant 0 : index
    %c0_1 = arith.constant 0 : index
    %0 = vector.load %arg1[%c0, %c0_0, %c0_1] : memref<1x8x256xf32, #tpu.memory_space<vmem>>, vector<1x8x256xf32>
    %c0_2 = arith.constant 0 : index
    %c0_3 = arith.constant 0 : index
    %c0_4 = arith.constant 0 : index
    %1 = vector.load %arg2[%c0_2, %c0_3, %c0_4] : memref<1x2x256xi32, #tpu.memory_space<vmem>>, vector<1x2x256xi32>
    %c0_5 = arith.constant 0 : index
    %c0_6 = arith.constant 0 : index
    %c0_7 = arith.constant 0 : index
    %2 = vector.load %arg3[%c0_5, %c0_6, %c0_7] : memref<1x8x1xf32, #tpu.memory_space<vmem>>, vector<1x8x1xf32>
    %3 = tpu.iota {dimensions = array<i32: 1>} : vector<1x8x256xi32>
    %4 = vector.extract_strided_slice %1 {offsets = [0, 0, 0], sizes = [1, 1, 256], strides = [1, 1, 1]} : vector<1x2x256xi32> to vector<1x1x256xi32>
    %c4_i32 = arith.constant 4 : i32
    %5 = vector.broadcast %c4_i32 : i32 to vector<1x8x256xi32>
    %6 = arith.cmpi sge, %3, %5 : vector<1x8x256xi32>
    %7 = vector.extract_strided_slice %1 {offsets = [0, 1, 0], sizes = [1, 1, 256], strides = [1, 1, 1]} : vector<1x2x256xi32> to vector<1x1x256xi32>
    %c4_i32_8 = arith.constant 4 : i32
    %8 = vector.broadcast %c4_i32_8 : i32 to vector<1x1x256xi32>
    %9 = arith.addi %7, %8 : vector<1x1x256xi32>
    %10 = vector.shape_cast %9 : vector<1x1x256xi32> to vector<1x1x256xi32>
    %11 = vector.broadcast %10 : vector<1x1x256xi32> to vector<1x8x256xi32>
    %12 = vector.shape_cast %4 : vector<1x1x256xi32> to vector<1x1x256xi32>
    %13 = vector.broadcast %12 : vector<1x1x256xi32> to vector<1x8x256xi32>
    %14 = arith.select %6, %11, %13 : vector<1x8x256xi1>, vector<1x8x256xi32>
    %15 = arith.cmpi eq, %14, %3 : vector<1x8x256xi32>
    %16 = arith.extui %15 : vector<1x8x256xi1> to vector<1x8x256xi32>
    %17 = arith.sitofp %16 : vector<1x8x256xi32> to vector<1x8x256xf32>
    %cst = arith.constant 0.000000e+00 : f32
    %18 = vector.broadcast %cst : f32 to vector<1x8x256xf32>
    %19 = arith.subf %18, %0 : vector<1x8x256xf32>
    %cst_9 = arith.constant 0.000000e+00 : f32
    %20 = vector.broadcast %cst_9 : f32 to vector<1x8x256xf32>
    %21 = arith.maximumf %19, %20 : vector<1x8x256xf32>
    %22 = math.absf %0 : vector<1x8x256xf32>
    %cst_10 = arith.constant 0.000000e+00 : f32
    %23 = vector.broadcast %cst_10 : f32 to vector<1x8x256xf32>
    %24 = arith.subf %23, %22 : vector<1x8x256xf32>
    %25 = math.exp %24 : vector<1x8x256xf32>
    %26 = math.log1p %25 : vector<1x8x256xf32>
    %27 = arith.addf %21, %26 : vector<1x8x256xf32>
    %28 = arith.addf %0, %27 : vector<1x8x256xf32>
    %29 = vector.broadcast %2 : vector<1x8x1xf32> to vector<1x8x256xf32>
    %30 = arith.mulf %29, %27 : vector<1x8x256xf32>
    %31 = arith.subf %30, %0 : vector<1x8x256xf32>
    %32 = arith.mulf %17, %31 : vector<1x8x256xf32>
    %33 = arith.addf %28, %32 : vector<1x8x256xf32>
    %cst_11 = arith.constant dense<0.000000e+00> : vector<8x256xf32>
    %34 = vector.multi_reduction <add>, %33, %cst_11 [0] : vector<1x8x256xf32> to vector<8x256xf32>
    %cst_12 = arith.constant dense<0.000000e+00> : vector<8xf32>
    %35 = vector.multi_reduction <add>, %34, %cst_12 [1] : vector<8x256xf32> to vector<8xf32>
    %36 = vector.shape_cast %35 : vector<8xf32> to vector<8x1xf32>
    %37 = vector.shape_cast %36 : vector<8x1xf32> to vector<1x8x1xf32>
    %cst_13 = arith.constant dense<0.000000e+00> : vector<1xf32>
    %38 = vector.multi_reduction <add>, %37, %cst_13 [1, 2] : vector<1x8x1xf32> to vector<1xf32>
    %39 = vector.shape_cast %38 : vector<1xf32> to vector<1x1x1xf32>
    %40 = vector.extract %39[0, 0, 0] : f32 from vector<1x1x1xf32>
    %41 = tpu.iota {dimensions = array<i32: 0>} : vector<8x128xi32>
    %42 = tpu.iota {dimensions = array<i32: 1>} : vector<8x128xi32>
    %c0_i32 = arith.constant 0 : i32
    %43 = vector.broadcast %c0_i32 : i32 to vector<8x128xi32>
    %44 = arith.cmpi eq, %41, %43 : vector<8x128xi32>
    %c0_i32_14 = arith.constant 0 : i32
    %45 = vector.broadcast %c0_i32_14 : i32 to vector<8x128xi32>
    %46 = arith.cmpi eq, %42, %45 : vector<8x128xi32>
    %47 = arith.andi %44, %46 : vector<8x128xi1>
    %cst_15 = arith.constant 0.000000e+00 : f32
    %48 = vector.broadcast %40 : f32 to vector<8x128xf32>
    %49 = vector.broadcast %cst_15 : f32 to vector<8x128xf32>
    %50 = arith.select %47, %48, %49 : vector<8x128xi1>, vector<8x128xf32>
    %c0_16 = arith.constant 0 : index
    %c0_17 = arith.constant 0 : index
    %51 = vector.load %arg4[%c0_16, %c0_17] : memref<8x128xf32, #tpu.memory_space<vmem>>, vector<8x128xf32>
    tpu.vector_store %arg4[%c0_16, %c0_17], %50 {strides = array<i32>} : memref<8x128xf32, #tpu.memory_space<vmem>>, vector<8x128xf32>,
    return
  }
  func.func @transform_0(%arg0: i32) -> (i32, i32, i32) {
    %c0_i32 = arith.constant 0 : i32
    %c0_i32_0 = arith.constant 0 : i32
    %c0_i32_1 = arith.constant 0 : i32
    return %c0_i32, %c0_i32_0, %arg0 : i32, i32, i32
  }
  func.func @transform_1(%arg0: i32) -> (i32, i32, i32) {
    %c0_i32 = arith.constant 0 : i32
    %c0_i32_0 = arith.constant 0 : i32
    %c0_i32_1 = arith.constant 0 : i32
    return %c0_i32, %c0_i32_0, %arg0 : i32, i32, i32
  }
  func.func @transform_2(%arg0: i32) -> (i32, i32, i32) {
    %c0_i32 = arith.constant 0 : i32
    %c0_i32_0 = arith.constant 0 : i32
    %c0_i32_1 = arith.constant 0 : i32
    %c0_i32_2 = arith.constant 0 : i32
    return %c0_i32, %c0_i32_0, %c0_i32_1 : i32, i32, i32
  }
  func.func @transform_3(%arg0: i32) -> (i32, i32) {
    %c0_i32 = arith.constant 0 : i32
    %c0_i32_0 = arith.constant 0 : i32
    return %c0_i32, %arg0 : i32, i32
  }
}

</mosaic_0001>

<llo_original>
// kernel: tpu_custom_call.1
$region0: #{tpu_custom_call.1}
  #allocation0 [shape = 'u32[]', space=smem, size = 0x4, offset = 0x4, fixed_abs, tag = 'smem constant byte address 0x4 - core index']
  #allocation1 [shape = 'u32[144,128]{1,0:T(1,128)}', space=vmem, size = 0x12000, scoped, tag = 'internal scratch']
  %s0 = inlined_call_operand.hbm [shape: f32[1,8,256], index: 0, kind: input, shape index: {}]
  %s1 = inlined_call_operand.vmem [shape: s32[1,2,256], index: 1, kind: input, shape index: {}]
  %s2 = inlined_call_operand.vmem [shape: f32[1,8,1], index: 2, kind: input, shape index: {}]
  %s3 = inlined_call_operand.hbm [shape: f32[8,128], index: 3, kind: output, shape index: {}]
  %s4 = sld [smem:[#allocation0]]
  $region26: #{tpu_custom_call.1} parent=0
    _
  %s6 = ssub.s32 1, %s4
  %s7 = scalar_select 0, %s6, %s4
  $region1: #{tpu_custom_call.1} parent=0
    #allocation2 [shape = 'u8[8192]{0}', space=vmem, size = 0x2000, scoped, tag = 'input window, operand 0, single buffered']
    #allocation3 [shape = 's32[1]{0}', space=sflag, size = 0x4, scoped, tag = 'scoped memory for tpu_custom_call.1']
    #allocation4 [shape = 's32[1]{0}', space=sflag, size = 0x4, scoped, tag = 'scoped memory for tpu_custom_call.1']
    #allocation5 [shape = 'u8[4096]{0}', space=vmem, size = 0x1000, scoped, tag = 'output window, operand 0, single buffered']
    %8 = vsyncpa [#allocation3], 0
    %9 = vsyncpa [#allocation4], 0
    // Predicated region
    $region2: #{tpu_custom_call.1} parent=1 // pred_check
      _
    $region3: #{tpu_custom_call.1} parent=1 // pred_check_branch
      %11 = sbr.rel (0) target = $region5
    $region4: #{tpu_custom_call.1} parent=1 // pred_region
      %s13 = ssub.s32 256, 256
      %14 = vsyncadd [#allocation3], %s13
      %s16 = sshll.u32 [#allocation2], 4
      %s17 = int_to_ptr.vmem [resolvable:$true] %s16
      %19 = dma.hbm_to_vmem [thread:$0]  %s0, 256, %s17, [#allocation3]
    $region5: #{tpu_custom_call.1} parent=1 // pred_fallthru
      _
    // Predicated region
    $region6: #{tpu_custom_call.1} parent=1 // pred_check
      _
    $region7: #{tpu_custom_call.1} parent=1 // pred_check_branch
      %21 = sbr.rel (0) target = $region9
    $region8: #{tpu_custom_call.1} parent=1 // pred_region
      _
    $region9: #{tpu_custom_call.1} parent=1 // pred_fallthru
      _
    // Predicated region
    $region10: #{tpu_custom_call.1} parent=1 // pred_check
      _
    $region11: #{tpu_custom_call.1} parent=1 // pred_check_branch
      %23 = sbr.rel (0) target = $region13
    $region12: #{tpu_custom_call.1} parent=1 // pred_region
      _
    $region13: #{tpu_custom_call.1} parent=1 // pred_fallthru
      _
    // Predicated region
    $region14: #{tpu_custom_call.1} parent=1 // pred_check
      _
    $region15: #{tpu_custom_call.1} parent=1 // pred_check_branch
      %25 = sbr.rel (0) target = $region17
    $region16: #{tpu_custom_call.1} parent=1 // pred_region
      %26 = dma.done [#allocation3], 256
    $region17: #{tpu_custom_call.1} parent=1 // pred_fallthru
      _
    %v27 = vld [vmem:[#allocation2] sm:$0xff]
    %v28 = vld [vmem:[#allocation2 + $0x8] sm:$0xff]
    %v29 = vld [vmem:[%s1] sm:$0xf]
    %v30 = vld [vmem:[%s2] sm:$0xff]
    %v31 = vlaneseq
    %v32 = vshrl.u32 %v31, 7
    %vm33 = vcmp.ge.s32.totalorder %v32, 4
    %v34 = vadd.s32 %v29, 4
    %v35 = vlaneseq
    %v36 = vshrl.u32 %v35, 7
    %v37 = vsub.s32 1, %v36
    %v38 = vrot.slane %v34, %v37
    %v39 = vlaneseq
    %v40 = vshrl.u32 %v39, 7
    %v41 = vsub.s32 3, %v40
    %v42 = vrot.slane %v34, %v41
    %v43 = vlaneseq
    %v44 = vshrl.u32 %v43, 7
    %v45 = vsub.s32 1, %v44
    %v46 = vrot.slane %v38, %v45
    %v47 = vlaneseq
    %v48 = vshrl.u32 %v47, 7
    %v49 = vsub.s32 1, %v48
    %v50 = vrot.slane %v42, %v49
    %v51 = vlaneseq
    %v52 = vshrl.u32 %v51, 7
    %v53 = vsub.s32 0, %v52
    %v54 = vrot.slane %v29, %v53
    %v55 = vlaneseq
    %v56 = vshrl.u32 %v55, 7
    %v57 = vsub.s32 2, %v56
    %v58 = vrot.slane %v29, %v57
    %v59 = vlaneseq
    %v60 = vshrl.u32 %v59, 7
    %v61 = vsub.s32 0, %v60
    %v62 = vrot.slane %v54, %v61
    %v63 = vlaneseq
    %v64 = vshrl.u32 %v63, 7
    %v65 = vsub.s32 0, %v64
    %v66 = vrot.slane %v58, %v65
    %v67 = vsel %vm33, %v46, %v62
    %v68 = vsel %vm33, %v50, %v66
    %vm69 = vcmp.eq.s32.totalorder %v67, %v32
    %vm70 = vcmp.eq.s32.totalorder %v68, %v32
    %v71 = vsel %vm69, 1, 0
    %v72 = vsel %vm70, 1, 0
    %v73 = vcvt.s32.f32 %v71
    %v74 = vcvt.s32.f32 %v72
    %v75 = vsub.f32 0.0, %v27
    %v76 = vsub.f32 0.0, %v28
    %v77 = vmax.f32 %v75, 0.0
    %v78 = vmax.f32 %v76, 0.0
    %v79 = vand.u32 2147483647, %v27
    %v80 = vand.u32 2147483647, %v28
    %v81 = vsub.f32 0.0, %v79
    %v82 = vsub.f32 0.0, %v80
    %v83 = vmul.f32 %v81, 1.442695
    %v84 = vpow.pop %v83
    %v85 = vmul.f32 %v82, 1.442695
    %v86 = vpow.pop %v85
    %v87 = vadd.f32 %v84, 1.0
    %v88 = vlog2.pop %v87
    %v89 = vmul.f32 %v88, 0.6931472
    %v90 = vmul.f32 -0.5, %v84
    %v91 = vadd.f32 %v90, 1.0
    %v92 = vmul.f32 %v91, %v84
    %v93 = vand.u32 2147483647, %v84
    %vm94 = vcmp.lt.f32.partialorder %v93, 0.0004427343
    %v95 = vsel %vm94, %v92, %v89
    %v96 = vadd.f32 %v86, 1.0
    %v97 = vlog2.pop %v96
    %v98 = vmul.f32 %v97, 0.6931472
    %v99 = vmul.f32 -0.5, %v86
    %v100 = vadd.f32 %v99, 1.0
    %v101 = vmul.f32 %v100, %v86
    %v102 = vand.u32 2147483647, %v86
    %vm103 = vcmp.lt.f32.partialorder %v102, 0.0004427343
    %v104 = vsel %vm103, %v101, %v98
    %v105 = vadd.f32 %v77, %v95
    %v106 = vadd.f32 %v78, %v104
    %v107 = vadd.f32 %v27, %v105
    %v108 = vadd.f32 %v28, %v106
    %110 = vset.pattern.permute.xlu0 0
    %111 = vperm.xlu0 %110, %v30
    %v112 = vpop.permute.xlu0 %111
    %v114 = vmul.f32 %v112, %v105
    %v115 = vmul.f32 %v112, %v106
    %v116 = vsub.f32 %v114, %v27
    %v117 = vsub.f32 %v115, %v28
    %v118 = vmul.f32 %v73, %v116
    %v119 = vmul.f32 %v74, %v117
    %v120 = vadd.f32 %v107, %v118
    %v121 = vadd.f32 %v108, %v119
    %v122 = vadd.f32 %v120, 0.0
    %v123 = vadd.f32 %v121, 0.0
    %v124 = vadd.f32 %v122, %v123
    %125 = vadd.xlane.f32.xlu0 %v124
    %v126 = vpop.xlane.xlu0 %125
    %vm127 = vcmask 7168
    %v128 = vsel %vm127, %v126, 0.0
    %129 = vadd.xlane.f32.xlu0 %v128
    %v130 = vpop.xlane.xlu0 %129
    %v131 = vrot.slane %v130, 4
    %v132 = vadd.f32 %v130, %v131
    %v133 = vrot.slane %v132, 2
    %v134 = vadd.f32 %v132, %v133
    %v135 = vrot.slane %v134, 1
    %v136 = vadd.f32 %v134, %v135
    %s137 = vtos %v136
    %v138 = vlaneseq
    %v139 = vand.u32 %v138, 127
    %vm140 = vcmp.eq.s32.totalorder %v32, 0
    %vm141 = vcmp.eq.s32.totalorder %v139, 0
    %vm142 = vmand %vm140, %vm141
    %v143 = vstv %s137
    %v144 = vsel %vm142, %v143, 0.0
    %145 = vst [vmem:[#allocation5] sm:$0xff] %v144
    // Predicated region
    $region18: #{tpu_custom_call.1} parent=1 // pred_check
      _
    $region19: #{tpu_custom_call.1} parent=1 // pred_check_branch
      %147 = sbr.rel (0) target = $region21
    $region20: #{tpu_custom_call.1} parent=1 // pred_region
      %s149 = ssub.s32 128, 128
      %150 = vsyncadd [#allocation4], %s149
      %s152 = sshll.u32 [#allocation5], 4
      %s153 = int_to_ptr.vmem [resolvable:$true] %s152
      %155 = dma.vmem_to_hbm [thread:$0]  %s153, 128, %s3, [#allocation4]
    $region21: #{tpu_custom_call.1} parent=1 // pred_fallthru
      _
    // Predicated region
    $region22: #{tpu_custom_call.1} parent=1 // pred_check
      _
    $region23: #{tpu_custom_call.1} parent=1 // pred_check_branch
      %157 = sbr.rel (0) target = $region25
    $region24: #{tpu_custom_call.1} parent=1 // pred_region
      %158 = dma.done [#allocation4], 128
    $region25: #{tpu_custom_call.1} parent=1 // pred_fallthru
      _
    %159 = vsyncpa [#allocation3], 1
    %160 = vsyncpa [#allocation4], 1

</llo_original>
